<compile_context>
chip_gen: v6e
topology: v6e:2x2x1
jax: 0.10.0
libtpu: 0.0.40
codegen_flags: <defaults>
</compile_context>

<pallas_src>
import jax
import jax.numpy as jnp
from jax import lax
from jax.experimental import pallas as pl
from jax.experimental.pallas import tpu as pltpu


def residual_block_kernel(x_ref, w1_ref, b1_ref, w2_ref, b2_ref, o_ref,
                          xpad_ref, ypad_ref):
    # x_ref  : (H, L) f32      lane-packed input block (L = P*W*C)
    # w*_ref : (3, L, L) bf16  banded per-ky conv weights (block-diag over P)
    # b*_ref : (1, L) f32      bias tiled over P*W
    # o_ref  : (H, L) f32
    # xpad_ref, ypad_ref : (H+2, L) bf16 scratch; rows 0 and H+1 are the
    #                      convs' implicit zero padding in the H direction.
    h, l = x_ref.shape

    # Zero only the halo rows; interiors are fully rewritten every grid step.
    # (Do NOT hoist this behind pl.when(program_id==0): on v7x each TensorCore
    # has its own scratch and would never see step 0.)
    zrow = jnp.zeros((1, l), dtype=xpad_ref.dtype)
    xpad_ref[0:1, :] = zrow
    xpad_ref[h + 1:h + 2, :] = zrow
    ypad_ref[0:1, :] = zrow
    ypad_ref[h + 1:h + 2, :] = zrow

    x = x_ref[...]                                       # f32 residual
    xpad_ref[1:1 + h, :] = x.astype(xpad_ref.dtype)      # bf16 MXU operand

    # Hoisted bias broadcasts initialize the accumulators (f32).
    b1 = jnp.broadcast_to(b1_ref[...], (h, l))
    b2 = jnp.broadcast_to(b2_ref[...], (h, l))

    # ---- conv1: 3 banded MXU matmuls (one per ky) + bias + ReLU ----
    acc = b1
    for ky in range(3):
        acc = acc + jnp.dot(xpad_ref[ky:ky + h, :], w1_ref[ky],
                            preferred_element_type=jnp.float32)
    # Interior of ypad = post-ReLU activation; the untouched zero halo rows are
    # exactly conv2's implicit zero padding in H.
    ypad_ref[1:1 + h, :] = jnp.maximum(acc, 0.0).astype(ypad_ref.dtype)

    # ---- conv2: 3 banded MXU matmuls + bias + residual + ReLU ----
    acc2 = b2
    for ky in range(3):
        acc2 = acc2 + jnp.dot(ypad_ref[ky:ky + h, :], w2_ref[ky],
                              preferred_element_type=jnp.float32)
    o_ref[...] = jnp.maximum(acc2 + x, 0.0).astype(o_ref.dtype)


def _banded_tap_weights(w, c, width, lane_pack, dtype):
    """(3,3,C,C) HWIO -> (3, L, L) banded per-ky weights, L = lane_pack*W*C.

    band[ky, p*C+ci, q*C+co] = w[ky, p-q+1, ci, co] for |p-q| <= 1, else 0,
    so (row @ band[ky])[q*C+co] = sum_{kx,ci} row[(q+kx-1)*C+ci] * w[ky,kx,ci,co]
    with the W-direction zero padding implicit in the missing off-band blocks.
    The L x L matrix is block-diagonal over the lane_pack packed images.
    """
    w = w.astype(jnp.float32)
    q = jnp.arange(width)
    band = jnp.zeros((3, width, width, c, c), jnp.float32)   # [ky, p, q, ci, co]
    for kx in range(3):
        # Input W-position p = q + kx - 1 feeds output position q through tap kx.
        sel = ((q[:, None] - q[None, :]) == (kx - 1)).astype(jnp.float32)  # [p, q]
        band = band + jnp.einsum('pq,kij->kpqij', sel, w[:, kx])
    wcp = width * c
    big = band.transpose(0, 1, 3, 2, 4).reshape(3, wcp, wcp)  # [ky, p*C+ci, q*C+co]
    if lane_pack > 1:
        eye = jnp.eye(lane_pack, dtype=jnp.float32)
        big = jnp.einsum('ab,kxy->kaxby', eye, big).reshape(
            3, lane_pack * wcp, lane_pack * wcp)
    return big.astype(dtype)


def residual_block(x_nchw, w1, b1, w2, b2, *, lane_pack=None):
    """Pallas ResidualBlock forward.

    x_nchw: [N, C, H, W] (PyTorch layout); w*: [3, 3, C, C] (HWIO); b*: [C].
    """
    n, c, h, w = x_nchw.shape
    wc = w * c

    if lane_pack is None:
        # Pack as many images per lane row as N's divisors allow, up to 256
        # lanes (full MXU width on v6e/v7x); prefer a multiple of 128 lanes so
        # vregs and output stores are dense.
        divisors = [d for d in range(1, n + 1) if n % d == 0 and d * wc <= 256]
        if not divisors:
            divisors = [1]
        pref = [d for d in divisors if (d * wc) % 128 == 0]
        lane_pack = max(pref) if pref else max(divisors)
    assert n % lane_pack == 0, "lane_pack must divide N"
    p = lane_pack
    g = n // p
    l = p * wc

    # Layout plumbing (wrapper-side, free): NCHW -> NHWC -> (G, H, P*W*C).
    x = jnp.transpose(x_nchw, (0, 2, 3, 1))                       # NHWC
    x = x.reshape(g, p, h, w, c).transpose(0, 2, 1, 3, 4).reshape(g, h, l)

    w1b = _banded_tap_weights(w1, c, w, p, jnp.bfloat16)
    w2b = _banded_tap_weights(w2, c, w, p, jnp.bfloat16)
    b1r = jnp.tile(b1.astype(jnp.float32), p * w).reshape(1, l)
    b2r = jnp.tile(b2.astype(jnp.float32), p * w).reshape(1, l)

    # TODO(synk): for non-toy H/W add row-band spatial tiling (2-row halo via
    # overlapping index_map blocks), budgeted against v7x's 64 MiB VMEM.
    out2d = pl.pallas_call(
        residual_block_kernel,
        out_shape=jax.ShapeDtypeStruct((g, h, l), x.dtype),
        grid_spec=pltpu.PrefetchScalarGridSpec(
            num_scalar_prefetch=0,
            grid=(g,),
            in_specs=[
                pl.BlockSpec((None, h, l), lambda i: (i, 0, 0)),
                pl.BlockSpec((3, l, l), lambda i: (0, 0, 0)),
                pl.BlockSpec((1, l), lambda i: (0, 0)),
                pl.BlockSpec((3, l, l), lambda i: (0, 0, 0)),
                pl.BlockSpec((1, l), lambda i: (0, 0)),
            ],
            out_specs=pl.BlockSpec((None, h, l), lambda i: (i, 0, 0)),
            scratch_shapes=[
                pltpu.VMEM((h + 2, l), jnp.bfloat16),
                pltpu.VMEM((h + 2, l), jnp.bfloat16),
            ],
        ),
        compiler_params=pltpu.CompilerParams(
            dimension_semantics=("parallel",)),
    )(x, w1b, b1r, w2b, b2r)

    out = out2d.reshape(g, h, p, w, c).transpose(0, 2, 1, 3, 4)
    out = out.reshape(n, h, w, c)
    return jnp.transpose(out, (0, 3, 1, 2))                       # back to NCHW


def residual_block_ref(x_nchw, w1, b1, w2, b2):
    """Pure-JAX reference (matches torch semantics)."""
    x = jnp.transpose(x_nchw, (0, 2, 3, 1))
    dn = lax.conv_dimension_numbers(x.shape, w1.shape, ("NHWC", "HWIO", "NHWC"))
    y = lax.conv_general_dilated(x, w1, (1, 1), "SAME", dimension_numbers=dn,
                                 precision=lax.Precision.HIGHEST) + b1
    y = jnp.maximum(y, 0.0)
    y = lax.conv_general_dilated(y, w2, (1, 1), "SAME", dimension_numbers=dn,
                                 precision=lax.Precision.HIGHEST) + b2
    out = jnp.maximum(x + y, 0.0)
    return jnp.transpose(out, (0, 3, 1, 2))


if __name__ == "__main__":
    key = jax.random.PRNGKey(0)
    kx, kw1, kb1, kw2, kb2 = jax.random.split(key, 5)

    N, C, H, W = 2, 4, 16, 16
    x = jax.random.normal(kx, (N, C, H, W), dtype=jnp.float32)

    # Deterministic synthetic parameters (HWIO layout for conv weights).
    w1 = 0.1 * jax.random.normal(kw1, (3, 3, C, C), dtype=jnp.float32)
    b1 = 0.1 * jax.random.normal(kb1, (C,), dtype=jnp.float32)
    w2 = 0.1 * jax.random.normal(kw2, (3, 3, C, C), dtype=jnp.float32)
    b2 = 0.1 * jax.random.normal(kb2, (C,), dtype=jnp.float32)

    out = residual_block(x, w1, b1, w2, b2)
    jax.block_until_ready(out)

    ref = residual_block_ref(x, w1, b1, w2, b2)
    assert out.shape == (N, C, H, W) and out.dtype == jnp.float32
    # Tolerance absorbs bf16 MXU operands with f32 accumulation at these
    # magnitudes (0.1-scale weights, unit-scale activations -> ~1e-2 worst
    # case); real indexing/layout bugs produce O(0.1..1) errors and are caught.
    err = float(jnp.max(jnp.abs(out - ref)))
    assert err < 3e-2, f"mismatch vs reference: max abs err {err}"

    print("KERNEL_OK")
</pallas_src>

<mosaic_0001>
module attributes {stable_mosaic.version = 11 : i64} {
  func.func @residual_block_kernel(%arg0: i32, %arg1: memref<1x16x128xf32, #tpu.memory_space<vmem>>, %arg2: memref<3x128x128xbf16, #tpu.memory_space<vmem>>, %arg3: memref<1x128xf32, #tpu.memory_space<vmem>>, %arg4: memref<3x128x128xbf16, #tpu.memory_space<vmem>>, %arg5: memref<1x128xf32, #tpu.memory_space<vmem>>, %arg6: memref<1x16x128xf32, #tpu.memory_space<vmem>>, %arg7: memref<18x128xbf16, #tpu.memory_space<vmem>>, %arg8: memref<18x128xbf16, #tpu.memory_space<vmem>>) attributes {dimension_semantics = [#tpu.dimension_semantics<parallel>], iteration_bounds = array<i64: 1>, scalar_prefetch = 0 : i64, scratch_operands = 2 : i64, tpu.core_type = #tpu.core_type<tc>, window_params = [{transform_indices = @transform_0, window_bounds = array<i64: 1, 16, 128>}, {pipeline_mode = #tpu.pipeline_mode<synchronous>, transform_indices = @transform_1, window_bounds = array<i64: 3, 128, 128>}, {pipeline_mode = #tpu.pipeline_mode<synchronous>, transform_indices = @transform_2, window_bounds = array<i64: 1, 128>}, {pipeline_mode = #tpu.pipeline_mode<synchronous>, transform_indices = @transform_3, window_bounds = array<i64: 3, 128, 128>}, {pipeline_mode = #tpu.pipeline_mode<synchronous>, transform_indices = @transform_4, window_bounds = array<i64: 1, 128>}, {transform_indices = @transform_5, window_bounds = array<i64: 1, 16, 128>}]} {
    %cst = arith.constant 0.000000e+00 : bf16
    %0 = vector.broadcast %cst : bf16 to vector<1x128xbf16>
    %c0 = arith.constant 0 : index
    %c0_0 = arith.constant 0 : index
    %1 = vector.load %arg7[%c0, %c0_0] : memref<18x128xbf16, #tpu.memory_space<vmem>>, vector<1x128xbf16>
    tpu.vector_store %arg7[%c0, %c0_0], %0 {strides = array<i32>} : memref<18x128xbf16, #tpu.memory_space<vmem>>, vector<1x128xbf16>,
    %c17 = arith.constant 17 : index
    %c0_1 = arith.constant 0 : index
    %2 = vector.load %arg7[%c17, %c0_1] : memref<18x128xbf16, #tpu.memory_space<vmem>>, vector<1x128xbf16>
    tpu.vector_store %arg7[%c17, %c0_1], %0 {strides = array<i32>} : memref<18x128xbf16, #tpu.memory_space<vmem>>, vector<1x128xbf16>,
    %c0_2 = arith.constant 0 : index
    %c0_3 = arith.constant 0 : index
    %3 = vector.load %arg8[%c0_2, %c0_3] : memref<18x128xbf16, #tpu.memory_space<vmem>>, vector<1x128xbf16>
    tpu.vector_store %arg8[%c0_2, %c0_3], %0 {strides = array<i32>} : memref<18x128xbf16, #tpu.memory_space<vmem>>, vector<1x128xbf16>,
    %c17_4 = arith.constant 17 : index
    %c0_5 = arith.constant 0 : index
    %4 = vector.load %arg8[%c17_4, %c0_5] : memref<18x128xbf16, #tpu.memory_space<vmem>>, vector<1x128xbf16>
    tpu.vector_store %arg8[%c17_4, %c0_5], %0 {strides = array<i32>} : memref<18x128xbf16, #tpu.memory_space<vmem>>, vector<1x128xbf16>,
    %c0_6 = arith.constant 0 : index
    %c0_7 = arith.constant 0 : index
    %c0_8 = arith.constant 0 : index
    %5 = vector.load %arg1[%c0_6, %c0_7, %c0_8] : memref<1x16x128xf32, #tpu.memory_space<vmem>>, vector<1x16x128xf32>
    %6 = vector.shape_cast %5 : vector<1x16x128xf32> to vector<16x128xf32>
    %7 = arith.truncf %6 : vector<16x128xf32> to vector<16x128xbf16>
    %c1 = arith.constant 1 : index
    %c0_9 = arith.constant 0 : index
    %8 = vector.load %arg7[%c1, %c0_9] : memref<18x128xbf16, #tpu.memory_space<vmem>>, vector<16x128xbf16>
    tpu.vector_store %arg7[%c1, %c0_9], %7 {strides = array<i32>} : memref<18x128xbf16, #tpu.memory_space<vmem>>, vector<16x128xbf16>,
    %c0_10 = arith.constant 0 : index
    %c0_11 = arith.constant 0 : index
    %9 = vector.load %arg3[%c0_10, %c0_11] : memref<1x128xf32, #tpu.memory_space<vmem>>, vector<1x128xf32>
    %10 = vector.shape_cast %9 : vector<1x128xf32> to vector<1x128xf32>
    %11 = vector.broadcast %10 : vector<1x128xf32> to vector<16x128xf32>
    %c0_12 = arith.constant 0 : index
    %c0_13 = arith.constant 0 : index
    %12 = vector.load %arg5[%c0_12, %c0_13] : memref<1x128xf32, #tpu.memory_space<vmem>>, vector<1x128xf32>
    %13 = vector.shape_cast %12 : vector<1x128xf32> to vector<1x128xf32>
    %14 = vector.broadcast %13 : vector<1x128xf32> to vector<16x128xf32>
    %c0_14 = arith.constant 0 : index
    %c0_15 = arith.constant 0 : index
    %15 = vector.load %arg7[%c0_14, %c0_15] : memref<18x128xbf16, #tpu.memory_space<vmem>>, vector<16x128xbf16>
    %c0_16 = arith.constant 0 : index
    %c0_17 = arith.constant 0 : index
    %c0_18 = arith.constant 0 : index
    %16 = vector.load %arg2[%c0_16, %c0_17, %c0_18] : memref<3x128x128xbf16, #tpu.memory_space<vmem>>, vector<1x128x128xbf16>
    %17 = vector.shape_cast %16 : vector<1x128x128xbf16> to vector<128x128xbf16>
    %cst_19 = arith.constant dense<0.000000e+00> : vector<16x128xf32>
    %18 = tpu.matmul %15, %17, %cst_19 {dimension_numbers = #tpu.dot_dimension_numbers<[1], [0], [0], [1], [0, 0, 1, 1], [], []>} : vector<16x128xbf16>, vector<128x128xbf16>, vector<16x128xf32> -> vector<16x128xf32>
    %19 = arith.addf %11, %18 : vector<16x128xf32>
    %c1_20 = arith.constant 1 : index
    %c0_21 = arith.constant 0 : index
    %20 = vector.load %arg7[%c1_20, %c0_21] : memref<18x128xbf16, #tpu.memory_space<vmem>>, vector<16x128xbf16>
    %c1_22 = arith.constant 1 : index
    %c0_23 = arith.constant 0 : index
    %c0_24 = arith.constant 0 : index
    %21 = vector.load %arg2[%c1_22, %c0_23, %c0_24] : memref<3x128x128xbf16, #tpu.memory_space<vmem>>, vector<1x128x128xbf16>
    %22 = vector.shape_cast %21 : vector<1x128x128xbf16> to vector<128x128xbf16>
    %cst_25 = arith.constant dense<0.000000e+00> : vector<16x128xf32>
    %23 = tpu.matmul %20, %22, %cst_25 {dimension_numbers = #tpu.dot_dimension_numbers<[1], [0], [0], [1], [0, 0, 1, 1], [], []>} : vector<16x128xbf16>, vector<128x128xbf16>, vector<16x128xf32> -> vector<16x128xf32>
    %24 = arith.addf %19, %23 : vector<16x128xf32>
    %c2 = arith.constant 2 : index
    %c0_26 = arith.constant 0 : index
    %25 = vector.load %arg7[%c2, %c0_26] : memref<18x128xbf16, #tpu.memory_space<vmem>>, vector<16x128xbf16>
    %c2_27 = arith.constant 2 : index
    %c0_28 = arith.constant 0 : index
    %c0_29 = arith.constant 0 : index
    %26 = vector.load %arg2[%c2_27, %c0_28, %c0_29] : memref<3x128x128xbf16, #tpu.memory_space<vmem>>, vector<1x128x128xbf16>
    %27 = vector.shape_cast %26 : vector<1x128x128xbf16> to vector<128x128xbf16>
    %cst_30 = arith.constant dense<0.000000e+00> : vector<16x128xf32>
    %28 = tpu.matmul %25, %27, %cst_30 {dimension_numbers = #tpu.dot_dimension_numbers<[1], [0], [0], [1], [0, 0, 1, 1], [], []>} : vector<16x128xbf16>, vector<128x128xbf16>, vector<16x128xf32> -> vector<16x128xf32>
    %29 = arith.addf %24, %28 : vector<16x128xf32>
    %cst_31 = arith.constant 0.000000e+00 : f32
    %30 = vector.broadcast %cst_31 : f32 to vector<16x128xf32>
    %31 = arith.maximumf %29, %30 : vector<16x128xf32>
    %32 = arith.truncf %31 : vector<16x128xf32> to vector<16x128xbf16>
    %c1_32 = arith.constant 1 : index
    %c0_33 = arith.constant 0 : index
    %33 = vector.load %arg8[%c1_32, %c0_33] : memref<18x128xbf16, #tpu.memory_space<vmem>>, vector<16x128xbf16>
    tpu.vector_store %arg8[%c1_32, %c0_33], %32 {strides = array<i32>} : memref<18x128xbf16, #tpu.memory_space<vmem>>, vector<16x128xbf16>,
    %c0_34 = arith.constant 0 : index
    %c0_35 = arith.constant 0 : index
    %34 = vector.load %arg8[%c0_34, %c0_35] : memref<18x128xbf16, #tpu.memory_space<vmem>>, vector<16x128xbf16>
    %c0_36 = arith.constant 0 : index
    %c0_37 = arith.constant 0 : index
    %c0_38 = arith.constant 0 : index
    %35 = vector.load %arg4[%c0_36, %c0_37, %c0_38] : memref<3x128x128xbf16, #tpu.memory_space<vmem>>, vector<1x128x128xbf16>
    %36 = vector.shape_cast %35 : vector<1x128x128xbf16> to vector<128x128xbf16>
    %cst_39 = arith.constant dense<0.000000e+00> : vector<16x128xf32>
    %37 = tpu.matmul %34, %36, %cst_39 {dimension_numbers = #tpu.dot_dimension_numbers<[1], [0], [0], [1], [0, 0, 1, 1], [], []>} : vector<16x128xbf16>, vector<128x128xbf16>, vector<16x128xf32> -> vector<16x128xf32>
    %38 = arith.addf %14, %37 : vector<16x128xf32>
    %c1_40 = arith.constant 1 : index
    %c0_41 = arith.constant 0 : index
    %39 = vector.load %arg8[%c1_40, %c0_41] : memref<18x128xbf16, #tpu.memory_space<vmem>>, vector<16x128xbf16>
    %c1_42 = arith.constant 1 : index
    %c0_43 = arith.constant 0 : index
    %c0_44 = arith.constant 0 : index
    %40 = vector.load %arg4[%c1_42, %c0_43, %c0_44] : memref<3x128x128xbf16, #tpu.memory_space<vmem>>, vector<1x128x128xbf16>
    %41 = vector.shape_cast %40 : vector<1x128x128xbf16> to vector<128x128xbf16>
    %cst_45 = arith.constant dense<0.000000e+00> : vector<16x128xf32>
    %42 = tpu.matmul %39, %41, %cst_45 {dimension_numbers = #tpu.dot_dimension_numbers<[1], [0], [0], [1], [0, 0, 1, 1], [], []>} : vector<16x128xbf16>, vector<128x128xbf16>, vector<16x128xf32> -> vector<16x128xf32>
    %43 = arith.addf %38, %42 : vector<16x128xf32>
    %c2_46 = arith.constant 2 : index
    %c0_47 = arith.constant 0 : index
    %44 = vector.load %arg8[%c2_46, %c0_47] : memref<18x128xbf16, #tpu.memory_space<vmem>>, vector<16x128xbf16>
    %c2_48 = arith.constant 2 : index
    %c0_49 = arith.constant 0 : index
    %c0_50 = arith.constant 0 : index
    %45 = vector.load %arg4[%c2_48, %c0_49, %c0_50] : memref<3x128x128xbf16, #tpu.memory_space<vmem>>, vector<1x128x128xbf16>
    %46 = vector.shape_cast %45 : vector<1x128x128xbf16> to vector<128x128xbf16>
    %cst_51 = arith.constant dense<0.000000e+00> : vector<16x128xf32>
    %47 = tpu.matmul %44, %46, %cst_51 {dimension_numbers = #tpu.dot_dimension_numbers<[1], [0], [0], [1], [0, 0, 1, 1], [], []>} : vector<16x128xbf16>, vector<128x128xbf16>, vector<16x128xf32> -> vector<16x128xf32>
    %48 = arith.addf %43, %47 : vector<16x128xf32>
    %49 = arith.addf %48, %6 : vector<16x128xf32>
    %cst_52 = arith.constant 0.000000e+00 : f32
    %50 = vector.broadcast %cst_52 : f32 to vector<16x128xf32>
    %51 = arith.maximumf %49, %50 : vector<16x128xf32>
    %c0_53 = arith.constant 0 : index
    %c0_54 = arith.constant 0 : index
    %c0_55 = arith.constant 0 : index
    %52 = vector.load %arg6[%c0_53, %c0_54, %c0_55] : memref<1x16x128xf32, #tpu.memory_space<vmem>>, vector<1x16x128xf32>
    %53 = vector.shape_cast %52 : vector<1x16x128xf32> to vector<16x128xf32>
    %54 = vector.shape_cast %51 : vector<16x128xf32> to vector<1x16x128xf32>
    tpu.vector_store %arg6[%c0_53, %c0_54, %c0_55], %54 {strides = array<i32>} : memref<1x16x128xf32, #tpu.memory_space<vmem>>, vector<1x16x128xf32>,
    return
  }
  func.func @transform_0(%arg0: i32) -> (i32, i32, i32) {
    %c0_i32 = arith.constant 0 : i32
    %c0_i32_0 = arith.constant 0 : i32
    %c0_i32_1 = arith.constant 0 : i32
    return %arg0, %c0_i32, %c0_i32_0 : i32, i32, i32
  }
  func.func @transform_1(%arg0: i32) -> (i32, i32, i32) {
    %c0_i32 = arith.constant 0 : i32
    %c0_i32_0 = arith.constant 0 : i32
    %c0_i32_1 = arith.constant 0 : i32
    %c0_i32_2 = arith.constant 0 : i32
    return %c0_i32, %c0_i32_0, %c0_i32_1 : i32, i32, i32
  }
  func.func @transform_2(%arg0: i32) -> (i32, i32) {
    %c0_i32 = arith.constant 0 : i32
    %c0_i32_0 = arith.constant 0 : i32
    %c0_i32_1 = arith.constant 0 : i32
    return %c0_i32, %c0_i32_0 : i32, i32
  }
  func.func @transform_3(%arg0: i32) -> (i32, i32, i32) {
    %c0_i32 = arith.constant 0 : i32
    %c0_i32_0 = arith.constant 0 : i32
    %c0_i32_1 = arith.constant 0 : i32
    %c0_i32_2 = arith.constant 0 : i32
    return %c0_i32, %c0_i32_0, %c0_i32_1 : i32, i32, i32
  }
  func.func @transform_4(%arg0: i32) -> (i32, i32) {
    %c0_i32 = arith.constant 0 : i32
    %c0_i32_0 = arith.constant 0 : i32
    %c0_i32_1 = arith.constant 0 : i32
    return %c0_i32, %c0_i32_0 : i32, i32
  }
  func.func @transform_5(%arg0: i32) -> (i32, i32, i32) {
    %c0_i32 = arith.constant 0 : i32
    %c0_i32_0 = arith.constant 0 : i32
    %c0_i32_1 = arith.constant 0 : i32
    return %arg0, %c0_i32, %c0_i32_0 : i32, i32, i32
  }
}

</mosaic_0001>

<llo_original>
// kernel: tpu_custom_call.1
$region0: #{tpu_custom_call.1}
  #allocation0 [shape = 'u32[]', space=smem, size = 0x4, offset = 0x4, fixed_abs, tag = 'smem constant byte address 0x4 - core index']
  #allocation1 [shape = 'u32[144,128]{1,0:T(1,128)}', space=vmem, size = 0x12000, scoped, tag = 'internal scratch']
  #allocation2 [shape = 'bf16[18,128]{1,0:T(8,128)(2,1)}', space=vmem, size = 0x1800, scoped, tag = 'scratch operand']
  #allocation3 [shape = 'bf16[18,128]{1,0:T(8,128)(2,1)}', space=vmem, size = 0x1800, scoped, tag = 'scratch operand']
  %s0 = inlined_call_operand.hbm [shape: f32[1,16,128], index: 0, kind: input, shape index: {}]
  %s1 = inlined_call_operand.hbm [shape: bf16[3,128,128], index: 1, kind: input, shape index: {}]
  %s2 = inlined_call_operand.vmem [shape: f32[1,128], index: 2, kind: input, shape index: {}]
  %s3 = inlined_call_operand.hbm [shape: bf16[3,128,128], index: 3, kind: input, shape index: {}]
  %s4 = inlined_call_operand.vmem [shape: f32[1,128], index: 4, kind: input, shape index: {}]
  %s5 = inlined_call_operand.hbm [shape: f32[1,16,128], index: 5, kind: output, shape index: {}]
  %s6 = sld [smem:[#allocation0]]
  $region42: #{tpu_custom_call.1} parent=0
    _
  %s8 = ssub.s32 1, %s6
  %s9 = scalar_select 0, %s8, %s6
  $region1: #{tpu_custom_call.1} parent=0
    #allocation4 [shape = 'u8[8192]{0}', space=vmem, size = 0x2000, scoped, tag = 'input window, operand 0, single buffered']
    #allocation5 [shape = 's32[1]{0}', space=sflag, size = 0x4, scoped, tag = 'scoped memory for tpu_custom_call.1']
    #allocation6 [shape = 's32[1]{0}', space=sflag, size = 0x4, scoped, tag = 'scoped memory for tpu_custom_call.1']
    #allocation7 [shape = 'u8[98304]{0}', space=vmem, size = 0x18000, scoped, tag = 'input window, operand 1, single buffered']
    #allocation8 [shape = 's32[1]{0}', space=sflag, size = 0x4, scoped, tag = 'scoped memory for tpu_custom_call.1']
    #allocation9 [shape = 'u8[98304]{0}', space=vmem, size = 0x18000, scoped, tag = 'input window, operand 3, single buffered']
    #allocation10 [shape = 'u8[8192]{0}', space=vmem, size = 0x2000, scoped, tag = 'output window, operand 0, single buffered']
    %10 = vsyncpa [#allocation5], 0
    %11 = vsyncpa [#allocation8], 0
    %12 = vsyncpa [#allocation6], 0
    // Predicated region
    $region2: #{tpu_custom_call.1} parent=1 // pred_check
      _
    $region3: #{tpu_custom_call.1} parent=1 // pred_check_branch
      %14 = sbr.rel (0) target = $region5
    $region4: #{tpu_custom_call.1} parent=1 // pred_region
      %s16 = ssub.s32 256, 256
      %17 = vsyncadd [#allocation5], %s16
      %s18 = sshll.u32 [#allocation4], 4
      %s19 = int_to_ptr.vmem [resolvable:$true] %s18
      %24 = dma.hbm_to_vmem [thread:$0]  %s0, 256, %s19, [#allocation5], 128, 128, 8
    $region5: #{tpu_custom_call.1} parent=1 // pred_fallthru
      _
    // Predicated region
    $region6: #{tpu_custom_call.1} parent=1 // pred_check
      _
    $region7: #{tpu_custom_call.1} parent=1 // pred_check_branch
      %26 = sbr.rel (0) target = $region9
    $region8: #{tpu_custom_call.1} parent=1 // pred_region
      %s28 = ssub.s32 3072, 3072
      %29 = vsyncadd [#allocation8], %s28
      %s30 = sshll.u32 [#allocation7], 4
      %s31 = int_to_ptr.vmem [resolvable:$true] %s30
      %36 = dma.hbm_to_vmem [thread:$0]  %s1, 3072, %s31, [#allocation8], 64, 64, 4
    $region9: #{tpu_custom_call.1} parent=1 // pred_fallthru
      _
    // Predicated region
    $region10: #{tpu_custom_call.1} parent=1 // pred_check
      _
    $region11: #{tpu_custom_call.1} parent=1 // pred_check_branch
      %38 = sbr.rel (0) target = $region13
    $region12: #{tpu_custom_call.1} parent=1 // pred_region
      _
    $region13: #{tpu_custom_call.1} parent=1 // pred_fallthru
      _
    // Predicated region
    $region14: #{tpu_custom_call.1} parent=1 // pred_check
      _
    $region15: #{tpu_custom_call.1} parent=1 // pred_check_branch
      %40 = sbr.rel (0) target = $region17
    $region16: #{tpu_custom_call.1} parent=1 // pred_region
      %s42 = ssub.s32 3072, 3072
      %43 = vsyncadd [#allocation8], %s42
      %s44 = sshll.u32 [#allocation9], 4
      %s45 = int_to_ptr.vmem [resolvable:$true] %s44
      %50 = dma.hbm_to_vmem [thread:$0]  %s3, 3072, %s45, [#allocation8], 64, 64, 4
    $region17: #{tpu_custom_call.1} parent=1 // pred_fallthru
      _
    // Predicated region
    $region18: #{tpu_custom_call.1} parent=1 // pred_check
      _
    $region19: #{tpu_custom_call.1} parent=1 // pred_check_branch
      %52 = sbr.rel (0) target = $region21
    $region20: #{tpu_custom_call.1} parent=1 // pred_region
      _
    $region21: #{tpu_custom_call.1} parent=1 // pred_fallthru
      _
    // Predicated region
    $region22: #{tpu_custom_call.1} parent=1 // pred_check
      _
    $region23: #{tpu_custom_call.1} parent=1 // pred_check_branch
      %54 = sbr.rel (0) target = $region25
    $region24: #{tpu_custom_call.1} parent=1 // pred_region
      %55 = dma.done [#allocation5], 256
    $region25: #{tpu_custom_call.1} parent=1 // pred_fallthru
      _
    // Predicated region
    $region26: #{tpu_custom_call.1} parent=1 // pred_check
      _
    $region27: #{tpu_custom_call.1} parent=1 // pred_check_branch
      %57 = sbr.rel (0) target = $region29
    $region28: #{tpu_custom_call.1} parent=1 // pred_region
      %58 = dma.done [#allocation8], 3072
    $region29: #{tpu_custom_call.1} parent=1 // pred_fallthru
      _
    // Predicated region
    $region30: #{tpu_custom_call.1} parent=1 // pred_check
      _
    $region31: #{tpu_custom_call.1} parent=1 // pred_check_branch
      %60 = sbr.rel (0) target = $region33
    $region32: #{tpu_custom_call.1} parent=1 // pred_region
      %61 = dma.done [#allocation8], 3072
    $region33: #{tpu_custom_call.1} parent=1 // pred_fallthru
      _
    %vm63 = vcmask 1040384
    %vm64 = vsmask.f32 256
    %vm65 = vmand %vm63, %vm64
    %v66 = vld [vmem:[#allocation2] sm:$0x1]
    %v67 = vsel %vm65, 0, %v66
    %68 = vst [vmem:[#allocation2] sm:$0x1] %v67
    %vm69 = vsmask.f32 7938
    %vm70 = vmand %vm63, %vm69
    %v71 = vld [vmem:[#allocation2 + $0x8] sm:$0x1]
    %v72 = vsel %vm70, 0, %v71
    %73 = vst [vmem:[#allocation2 + $0x8] sm:$0x1] %v72
    %v74 = vld [vmem:[#allocation3] sm:$0x1]
    %v75 = vsel %vm65, 0, %v74
    %76 = vst [vmem:[#allocation3] sm:$0x1] %v75
    %v77 = vld [vmem:[#allocation3 + $0x8] sm:$0x1]
    %v78 = vsel %vm70, 0, %v77
    %79 = vst [vmem:[#allocation3 + $0x8] sm:$0x1] %v78
    %v80 = vld [vmem:[#allocation4] sm:$0xff]
    %v81 = vld [vmem:[#allocation4 + $0x8] sm:$0xff]
    %v82 = vpack.c.bf16 %v81, %v80
    %v84 = vunpack.c.l.b16 %v82
    %v85 = vunpack.c.h.b16 %v82
    %v86 = vpack.c.b16 %v84, %v84
    %v87 = vpack.c.b16 %v85, %v85
    %vm88 = vsmask.f32 4368
    %vm89 = vmor %vm64, %vm88
    %v91 = vshrl.u32 %v86, 16
    %v93 = vrot.slane %v91, 7
    %v94 = vshll.u32 %v86, 16
    %v96 = vor.u32 %v93, %v94
    %v97 = vrot.slane %v93, 4
    %v99 = vshrl.u32 %v87, 16
    %v101 = vrot.slane %v99, 7
    %v102 = vshll.u32 %v87, 16
    %v104 = vor.u32 %v101, %v102
    %v105 = vsel %vm89, %v97, %v104
    %v106 = vrot.slane %v101, 4
    %vm110 = vcmask 1043456
    %vm111 = vmand %vm110, %vm69
    %v112 = vld [vmem:[#allocation2] sm:$0xf]
    %v113 = vsel %vm111, %v96, %v112
    %114 = vst [vmem:[#allocation2] sm:$0xf] %v113
    %115 = vst [vmem:[#allocation2 + $0x4] sm:$0xf] %v105
    %v116 = vld [vmem:[#allocation2 + $0x8] sm:$0x1]
    %v117 = vsel %vm65, %v106, %v116
    %118 = vst [vmem:[#allocation2 + $0x8] sm:$0x1] %v117
    %v119 = vld [vmem:[%s2] sm:$0x1]
    %v121 = vlaneseq
    %v122 = vshrl.u32 %v121, 7
    %v123 = vsub.s32 0, %v122
    %v124 = vrot.slane %v119, %v123
    %v126 = vld [vmem:[%s4] sm:$0x1]
    %v128 = vlaneseq
    %v129 = vshrl.u32 %v128, 7
    %v130 = vsub.s32 0, %v129
    %v131 = vrot.slane %v126, %v130
    %v133 = vld [vmem:[#allocation2] sm:$0xf]
    %v134 = vld [vmem:[#allocation2 + $0x4] sm:$0xf]
    %v135 = vld [vmem:[#allocation7] sm:$0xf]
    %v136 = vld [vmem:[#allocation7 + $0x4] sm:$0xf]
    %v137 = vld [vmem:[#allocation7 + $0x8] sm:$0xf]
    %v138 = vld [vmem:[#allocation7 + $0xc] sm:$0xf]
    %v139 = vld [vmem:[#allocation7 + $0x10] sm:$0xf]
    %v140 = vld [vmem:[#allocation7 + $0x14] sm:$0xf]
    %v141 = vld [vmem:[#allocation7 + $0x18] sm:$0xf]
    %v142 = vld [vmem:[#allocation7 + $0x1c] sm:$0xf]
    %v143 = vld [vmem:[#allocation7 + $0x20] sm:$0xf]
    %v144 = vld [vmem:[#allocation7 + $0x24] sm:$0xf]
    %v145 = vld [vmem:[#allocation7 + $0x28] sm:$0xf]
    %v146 = vld [vmem:[#allocation7 + $0x2c] sm:$0xf]
    %v147 = vld [vmem:[#allocation7 + $0x30] sm:$0xf]
    %v148 = vld [vmem:[#allocation7 + $0x34] sm:$0xf]
    %v149 = vld [vmem:[#allocation7 + $0x38] sm:$0xf]
    %v150 = vld [vmem:[#allocation7 + $0x3c] sm:$0xf]
    %v153 = vunpack.c.l.b16 %v133
    %v154 = vunpack.c.l.b16 %v134
    %v155 = vpack.c.b16 %v154, %v153
    %v173 = vunpack.c.l.b16 %v135
    %v174 = vunpack.c.l.b16 %v136
    %v175 = vunpack.c.l.b16 %v137
    %v176 = vunpack.c.l.b16 %v138
    %v177 = vunpack.c.l.b16 %v139
    %v178 = vunpack.c.l.b16 %v140
    %v179 = vunpack.c.l.b16 %v141
    %v180 = vunpack.c.l.b16 %v142
    %v181 = vunpack.c.l.b16 %v143
    %v182 = vunpack.c.l.b16 %v144
    %v183 = vunpack.c.l.b16 %v145
    %v184 = vunpack.c.l.b16 %v146
    %v185 = vunpack.c.l.b16 %v147
    %v186 = vunpack.c.l.b16 %v148
    %v187 = vunpack.c.l.b16 %v149
    %v188 = vunpack.c.l.b16 %v150
    %v189 = vpack.c.b16 %v174, %v173
    %v190 = vpack.c.b16 %v176, %v175
    %v191 = vpack.c.b16 %v178, %v177
    %v192 = vpack.c.b16 %v180, %v179
    %v193 = vpack.c.b16 %v182, %v181
    %v194 = vpack.c.b16 %v184, %v183
    %v195 = vpack.c.b16 %v186, %v185
    %v196 = vpack.c.b16 %v188, %v187
    %205 = vmatprep.subr.bf16.mxu0 0
    %206 = vmatpush1.bf16.msra.mxu0 %v196
    %207 = vmatprep.subr.bf16.mxu0 0
    %208 = vmatpush1.bf16.msra.mxu0 %v195
    %209 = vmatprep.subr.bf16.mxu0 0
    %210 = vmatpush1.bf16.msra.mxu0 %v194
    %211 = vmatprep.subr.bf16.mxu0 0
    %212 = vmatpush1.bf16.msra.mxu0 %v193
    %213 = vmatprep.subr.bf16.mxu0 0
    %214 = vmatpush1.bf16.msra.mxu0 %v192
    %215 = vmatprep.subr.bf16.mxu0 0
    %216 = vmatpush1.bf16.msra.mxu0 %v191
    %217 = vmatprep.subr.bf16.mxu0 0
    %218 = vmatpush1.bf16.msra.mxu0 %v190
    %219 = vmatprep.subr.bf16.mxu0 0
    %220 = vmatpush1.bf16.msra.mxu0 %v189
    %221 = vmatprep.subr.bf16.mxu0 0
    %222 = vmatpush2.bf16.msra.mxu0 0
    %223 = vmatprep.subr.bf16.mxu0 0
    %224 = vmatpush2.bf16.msra.mxu0 0
    %225 = vmatprep.subr.bf16.mxu0 0
    %226 = vmatpush2.bf16.msra.mxu0 0
    %227 = vmatprep.subr.bf16.mxu0 0
    %228 = vmatpush2.bf16.msra.mxu0 0
    %229 = vmatprep.subr.bf16.mxu0 0
    %230 = vmatpush2.bf16.msra.mxu0 0
    %231 = vmatprep.subr.bf16.mxu0 0
    %232 = vmatpush2.bf16.msra.mxu0 0
    %233 = vmatprep.subr.bf16.mxu0 0
    %234 = vmatpush2.bf16.msra.mxu0 0
    %235 = vmatprep.subr.bf16.mxu0 0
    %236 = vmatpush2.bf16.msra.mxu0 0
    %237 = vmatprep.mubr.bf16.mxu0 0
    %238 = vmatmul.mubr.bf16.gmra.mxu0 %v155
    %v239 = vpop.f32.mrf.mxu0
    %v240 = vadd.f32 0.0, %v239
    %v241 = vpop.f32.mrf.mxu0
    %v242 = vpop.f32.mrf.mxu0
    %v243 = vadd.f32 0.0, %v242
    %v244 = vpop.f32.mrf.mxu0
    %245 = vdwg.mxu0
    %v246 = vadd.f32 %v124, %v240
    %v247 = vadd.f32 %v124, %v243
    %v248 = vld [vmem:[#allocation2] sm:$0xf]
    %v249 = vld [vmem:[#allocation2 + $0x4] sm:$0xf]
    %v250 = vld [vmem:[#allocation2 + $0x8] sm:$0x1]
    %s251 = scalar_lea.vmem [#allocation7], 64
    %v252 = vld [vmem:[%s251] sm:$0xf]
    %v253 = vld [vmem:[%s251 + $0x4] sm:$0xf]
    %v254 = vld [vmem:[%s251 + $0x8] sm:$0xf]
    %v255 = vld [vmem:[%s251 + $0xc] sm:$0xf]
    %v256 = vld [vmem:[%s251 + $0x10] sm:$0xf]
    %v257 = vld [vmem:[%s251 + $0x14] sm:$0xf]
    %v258 = vld [vmem:[%s251 + $0x18] sm:$0xf]
    %v259 = vld [vmem:[%s251 + $0x1c] sm:$0xf]
    %v260 = vld [vmem:[%s251 + $0x20] sm:$0xf]
    %v261 = vld [vmem:[%s251 + $0x24] sm:$0xf]
    %v262 = vld [vmem:[%s251 + $0x28] sm:$0xf]
    %v263 = vld [vmem:[%s251 + $0x2c] sm:$0xf]
    %v264 = vld [vmem:[%s251 + $0x30] sm:$0xf]
    %v265 = vld [vmem:[%s251 + $0x34] sm:$0xf]
    %v266 = vld [vmem:[%s251 + $0x38] sm:$0xf]
    %v267 = vld [vmem:[%s251 + $0x3c] sm:$0xf]
    %v271 = vunpack.c.l.b16 %v248
    %v272 = vunpack.c.l.b16 %v249
    %v273 = vunpack.c.l.b16 %v250
    %v274 = vpack.c.b16 %v272, %v271
    %v275 = vpack.c.b16 %v273, %v273
    %vm276 = vsmask.f32 7424
    %v278 = vshrl.u32 %v274, 16
    %v280 = vshll.u32 %v274, 16
    %v282 = vrot.slane %v280, 1
    %v283 = vor.u32 %v278, %v282
    %v285 = vshll.u32 %v275, 16
    %v287 = vrot.slane %v285, 1
    %v288 = vsel %vm276, %v283, %v287
    %v306 = vunpack.c.l.b16 %v252
    %v307 = vunpack.c.l.b16 %v253
    %v308 = vunpack.c.l.b16 %v254
    %v309 = vunpack.c.l.b16 %v255
    %v310 = vunpack.c.l.b16 %v256
    %v311 = vunpack.c.l.b16 %v257
    %v312 = vunpack.c.l.b16 %v258
    %v313 = vunpack.c.l.b16 %v259
    %v314 = vunpack.c.l.b16 %v260
    %v315 = vunpack.c.l.b16 %v261
    %v316 = vunpack.c.l.b16 %v262
    %v317 = vunpack.c.l.b16 %v263
    %v318 = vunpack.c.l.b16 %v264
    %v319 = vunpack.c.l.b16 %v265
    %v320 = vunpack.c.l.b16 %v266
    %v321 = vunpack.c.l.b16 %v267
    %v322 = vpack.c.b16 %v307, %v306
    %v323 = vpack.c.b16 %v309, %v308
    %v324 = vpack.c.b16 %v311, %v310
    %v325 = vpack.c.b16 %v313, %v312
    %v326 = vpack.c.b16 %v315, %v314
    %v327 = vpack.c.b16 %v317, %v316
    %v328 = vpack.c.b16 %v319, %v318
    %v329 = vpack.c.b16 %v321, %v320
    %338 = vmatprep.subr.bf16.mxu0 0
    %339 = vmatpush1.bf16.msra.mxu0 %v329
    %340 = vmatprep.subr.bf16.mxu0 0
    %341 = vmatpush1.bf16.msra.mxu0 %v328
    %342 = vmatprep.subr.bf16.mxu0 0
    %343 = vmatpush1.bf16.msra.mxu0 %v327
    %344 = vmatprep.subr.bf16.mxu0 0
    %345 = vmatpush1.bf16.msra.mxu0 %v326
    %346 = vmatprep.subr.bf16.mxu0 0
    %347 = vmatpush1.bf16.msra.mxu0 %v325
    %348 = vmatprep.subr.bf16.mxu0 0
    %349 = vmatpush1.bf16.msra.mxu0 %v324
    %350 = vmatprep.subr.bf16.mxu0 0
    %351 = vmatpush1.bf16.msra.mxu0 %v323
    %352 = vmatprep.subr.bf16.mxu0 0
    %353 = vmatpush1.bf16.msra.mxu0 %v322
    %354 = vmatprep.subr.bf16.mxu0 0
    %355 = vmatpush2.bf16.msra.mxu0 0
    %356 = vmatprep.subr.bf16.mxu0 0
    %357 = vmatpush2.bf16.msra.mxu0 0
    %358 = vmatprep.subr.bf16.mxu0 0
    %359 = vmatpush2.bf16.msra.mxu0 0
    %360 = vmatprep.subr.bf16.mxu0 0
    %361 = vmatpush2.bf16.msra.mxu0 0
    %362 = vmatprep.subr.bf16.mxu0 0
    %363 = vmatpush2.bf16.msra.mxu0 0
    %364 = vmatprep.subr.bf16.mxu0 0
    %365 = vmatpush2.bf16.msra.mxu0 0
    %366 = vmatprep.subr.bf16.mxu0 0
    %367 = vmatpush2.bf16.msra.mxu0 0
    %368 = vmatprep.subr.bf16.mxu0 0
    %369 = vmatpush2.bf16.msra.mxu0 0
    %370 = vmatprep.mubr.bf16.mxu0 0
    %371 = vmatmul.mubr.bf16.gmra.mxu0 %v288
    %v372 = vpop.f32.mrf.mxu0
    %v373 = vadd.f32 0.0, %v372
    %v374 = vpop.f32.mrf.mxu0
    %v375 = vpop.f32.mrf.mxu0
    %v376 = vadd.f32 0.0, %v375
    %v377 = vpop.f32.mrf.mxu0
    %378 = vdwg.mxu0
    %v379 = vadd.f32 %v246, %v373
    %v380 = vadd.f32 %v247, %v376
    %v381 = vld [vmem:[#allocation2] sm:$0xe]
    %s382 = scalar_lea.vmem [#allocation7], 128
    %v383 = vld [vmem:[%s382] sm:$0xf]
    %v384 = vld [vmem:[%s382 + $0x4] sm:$0xf]
    %v385 = vld [vmem:[%s382 + $0x8] sm:$0xf]
    %v386 = vld [vmem:[%s382 + $0xc] sm:$0xf]
    %v387 = vld [vmem:[%s382 + $0x10] sm:$0xf]
    %v388 = vld [vmem:[%s382 + $0x14] sm:$0xf]
    %v389 = vld [vmem:[%s382 + $0x18] sm:$0xf]
    %v390 = vld [vmem:[%s382 + $0x1c] sm:$0xf]
    %v391 = vld [vmem:[%s382 + $0x20] sm:$0xf]
    %v392 = vld [vmem:[%s382 + $0x24] sm:$0xf]
    %v393 = vld [vmem:[%s382 + $0x28] sm:$0xf]
    %v394 = vld [vmem:[%s382 + $0x2c] sm:$0xf]
    %v395 = vld [vmem:[%s382 + $0x30] sm:$0xf]
    %v396 = vld [vmem:[%s382 + $0x34] sm:$0xf]
    %v397 = vld [vmem:[%s382 + $0x38] sm:$0xf]
    %v398 = vld [vmem:[%s382 + $0x3c] sm:$0xf]
    %v400 = vunpack.c.l.b16 %v381
    %v401 = vpack.c.b16 %v272, %v400
    %vm402 = vcmask 1046528
    %v403 = vrot.slane %v401, 1
    %v404 = vrot.slane %v275, 1
    %v405 = vsel %vm402, %v403, %v404
    %v423 = vunpack.c.l.b16 %v383
    %v424 = vunpack.c.l.b16 %v384
    %v425 = vunpack.c.l.b16 %v385
    %v426 = vunpack.c.l.b16 %v386
    %v427 = vunpack.c.l.b16 %v387
    %v428 = vunpack.c.l.b16 %v388
    %v429 = vunpack.c.l.b16 %v389
    %v430 = vunpack.c.l.b16 %v390
    %v431 = vunpack.c.l.b16 %v391
    %v432 = vunpack.c.l.b16 %v392
    %v433 = vunpack.c.l.b16 %v393
    %v434 = vunpack.c.l.b16 %v394
    %v435 = vunpack.c.l.b16 %v395
    %v436 = vunpack.c.l.b16 %v396
    %v437 = vunpack.c.l.b16 %v397
    %v438 = vunpack.c.l.b16 %v398
    %v439 = vpack.c.b16 %v424, %v423
    %v440 = vpack.c.b16 %v426, %v425
    %v441 = vpack.c.b16 %v428, %v427
    %v442 = vpack.c.b16 %v430, %v429
    %v443 = vpack.c.b16 %v432, %v431
    %v444 = vpack.c.b16 %v434, %v433
    %v445 = vpack.c.b16 %v436, %v435
    %v446 = vpack.c.b16 %v438, %v437
    %455 = vmatprep.subr.bf16.mxu0 0
    %456 = vmatpush1.bf16.msra.mxu0 %v446
    %457 = vmatprep.subr.bf16.mxu0 0
    %458 = vmatpush1.bf16.msra.mxu0 %v445
    %459 = vmatprep.subr.bf16.mxu0 0
    %460 = vmatpush1.bf16.msra.mxu0 %v444
    %461 = vmatprep.subr.bf16.mxu0 0
    %462 = vmatpush1.bf16.msra.mxu0 %v443
    %463 = vmatprep.subr.bf16.mxu0 0
    %464 = vmatpush1.bf16.msra.mxu0 %v442
    %465 = vmatprep.subr.bf16.mxu0 0
    %466 = vmatpush1.bf16.msra.mxu0 %v441
    %467 = vmatprep.subr.bf16.mxu0 0
    %468 = vmatpush1.bf16.msra.mxu0 %v440
    %469 = vmatprep.subr.bf16.mxu0 0
    %470 = vmatpush1.bf16.msra.mxu0 %v439
    %471 = vmatprep.subr.bf16.mxu0 0
    %472 = vmatpush2.bf16.msra.mxu0 0
    %473 = vmatprep.subr.bf16.mxu0 0
    %474 = vmatpush2.bf16.msra.mxu0 0
    %475 = vmatprep.subr.bf16.mxu0 0
    %476 = vmatpush2.bf16.msra.mxu0 0
    %477 = vmatprep.subr.bf16.mxu0 0
    %478 = vmatpush2.bf16.msra.mxu0 0
    %479 = vmatprep.subr.bf16.mxu0 0
    %480 = vmatpush2.bf16.msra.mxu0 0
    %481 = vmatprep.subr.bf16.mxu0 0
    %482 = vmatpush2.bf16.msra.mxu0 0
    %483 = vmatprep.subr.bf16.mxu0 0
    %484 = vmatpush2.bf16.msra.mxu0 0
    %485 = vmatprep.subr.bf16.mxu0 0
    %486 = vmatpush2.bf16.msra.mxu0 0
    %487 = vmatprep.mubr.bf16.mxu0 0
    %488 = vmatmul.mubr.bf16.gmra.mxu0 %v405
    %v489 = vpop.f32.mrf.mxu0
    %v490 = vadd.f32 0.0, %v489
    %v491 = vpop.f32.mrf.mxu0
    %v492 = vpop.f32.mrf.mxu0
    %v493 = vadd.f32 0.0, %v492
    %v494 = vpop.f32.mrf.mxu0
    %495 = vdwg.mxu0
    %v496 = vadd.f32 %v379, %v490
    %v497 = vadd.f32 %v380, %v493
    %v498 = vmax.f32 %v496, 0.0
    %v499 = vmax.f32 %v497, 0.0
    %v500 = vpack.c.bf16 %v499, %v498
    %v502 = vunpack.c.l.b16 %v500
    %v503 = vunpack.c.h.b16 %v500
    %v504 = vpack.c.b16 %v502, %v502
    %v505 = vpack.c.b16 %v503, %v503
    %v507 = vshrl.u32 %v504, 16
    %v509 = vrot.slane %v507, 7
    %v510 = vshll.u32 %v504, 16
    %v512 = vor.u32 %v509, %v510
    %v513 = vrot.slane %v509, 4
    %v515 = vshrl.u32 %v505, 16
    %v517 = vrot.slane %v515, 7
    %v518 = vshll.u32 %v505, 16
    %v520 = vor.u32 %v517, %v518
    %v521 = vsel %vm89, %v513, %v520
    %v522 = vrot.slane %v517, 4
    %v526 = vld [vmem:[#allocation3] sm:$0xf]
    %v527 = vsel %vm111, %v512, %v526
    %528 = vst [vmem:[#allocation3] sm:$0xf] %v527
    %529 = vst [vmem:[#allocation3 + $0x4] sm:$0xf] %v521
    %v530 = vld [vmem:[#allocation3 + $0x8] sm:$0x1]
    %v531 = vsel %vm65, %v522, %v530
    %532 = vst [vmem:[#allocation3 + $0x8] sm:$0x1] %v531
    %v533 = vld [vmem:[#allocation3] sm:$0xf]
    %v534 = vld [vmem:[#allocation3 + $0x4] sm:$0xf]
    %v535 = vld [vmem:[#allocation9] sm:$0xf]
    %v536 = vld [vmem:[#allocation9 + $0x4] sm:$0xf]
    %v537 = vld [vmem:[#allocation9 + $0x8] sm:$0xf]
    %v538 = vld [vmem:[#allocation9 + $0xc] sm:$0xf]
    %v539 = vld [vmem:[#allocation9 + $0x10] sm:$0xf]
    %v540 = vld [vmem:[#allocation9 + $0x14] sm:$0xf]
    %v541 = vld [vmem:[#allocation9 + $0x18] sm:$0xf]
    %v542 = vld [vmem:[#allocation9 + $0x1c] sm:$0xf]
    %v543 = vld [vmem:[#allocation9 + $0x20] sm:$0xf]
    %v544 = vld [vmem:[#allocation9 + $0x24] sm:$0xf]
    %v545 = vld [vmem:[#allocation9 + $0x28] sm:$0xf]
    %v546 = vld [vmem:[#allocation9 + $0x2c] sm:$0xf]
    %v547 = vld [vmem:[#allocation9 + $0x30] sm:$0xf]
    %v548 = vld [vmem:[#allocation9 + $0x34] sm:$0xf]
    %v549 = vld [vmem:[#allocation9 + $0x38] sm:$0xf]
    %v550 = vld [vmem:[#allocation9 + $0x3c] sm:$0xf]
    %v553 = vunpack.c.l.b16 %v533
    %v554 = vunpack.c.l.b16 %v534
    %v555 = vpack.c.b16 %v554, %v553
    %v573 = vunpack.c.l.b16 %v535
    %v574 = vunpack.c.l.b16 %v536
    %v575 = vunpack.c.l.b16 %v537
    %v576 = vunpack.c.l.b16 %v538
    %v577 = vunpack.c.l.b16 %v539
    %v578 = vunpack.c.l.b16 %v540
    %v579 = vunpack.c.l.b16 %v541
    %v580 = vunpack.c.l.b16 %v542
    %v581 = vunpack.c.l.b16 %v543
    %v582 = vunpack.c.l.b16 %v544
    %v583 = vunpack.c.l.b16 %v545
    %v584 = vunpack.c.l.b16 %v546
    %v585 = vunpack.c.l.b16 %v547
    %v586 = vunpack.c.l.b16 %v548
    %v587 = vunpack.c.l.b16 %v549
    %v588 = vunpack.c.l.b16 %v550
    %v589 = vpack.c.b16 %v574, %v573
    %v590 = vpack.c.b16 %v576, %v575
    %v591 = vpack.c.b16 %v578, %v577
    %v592 = vpack.c.b16 %v580, %v579
    %v593 = vpack.c.b16 %v582, %v581
    %v594 = vpack.c.b16 %v584, %v583
    %v595 = vpack.c.b16 %v586, %v585
    %v596 = vpack.c.b16 %v588, %v587
    %605 = vmatprep.subr.bf16.mxu0 0
    %606 = vmatpush1.bf16.msra.mxu0 %v596
    %607 = vmatprep.subr.bf16.mxu0 0
    %608 = vmatpush1.bf16.msra.mxu0 %v595
    %609 = vmatprep.subr.bf16.mxu0 0
    %610 = vmatpush1.bf16.msra.mxu0 %v594
    %611 = vmatprep.subr.bf16.mxu0 0
    %612 = vmatpush1.bf16.msra.mxu0 %v593
    %613 = vmatprep.subr.bf16.mxu0 0
    %614 = vmatpush1.bf16.msra.mxu0 %v592
    %615 = vmatprep.subr.bf16.mxu0 0
    %616 = vmatpush1.bf16.msra.mxu0 %v591
    %617 = vmatprep.subr.bf16.mxu0 0
    %618 = vmatpush1.bf16.msra.mxu0 %v590
    %619 = vmatprep.subr.bf16.mxu0 0
    %620 = vmatpush1.bf16.msra.mxu0 %v589
    %621 = vmatprep.subr.bf16.mxu0 0
    %622 = vmatpush2.bf16.msra.mxu0 0
    %623 = vmatprep.subr.bf16.mxu0 0
    %624 = vmatpush2.bf16.msra.mxu0 0
    %625 = vmatprep.subr.bf16.mxu0 0
    %626 = vmatpush2.bf16.msra.mxu0 0
    %627 = vmatprep.subr.bf16.mxu0 0
    %628 = vmatpush2.bf16.msra.mxu0 0
    %629 = vmatprep.subr.bf16.mxu0 0
    %630 = vmatpush2.bf16.msra.mxu0 0
    %631 = vmatprep.subr.bf16.mxu0 0
    %632 = vmatpush2.bf16.msra.mxu0 0
    %633 = vmatprep.subr.bf16.mxu0 0
    %634 = vmatpush2.bf16.msra.mxu0 0
    %635 = vmatprep.subr.bf16.mxu0 0
    %636 = vmatpush2.bf16.msra.mxu0 0
    %637 = vmatprep.mubr.bf16.mxu0 0
    %638 = vmatmul.mubr.bf16.gmra.mxu0 %v555
    %v639 = vpop.f32.mrf.mxu0
    %v640 = vadd.f32 0.0, %v639
    %v641 = vpop.f32.mrf.mxu0
    %v642 = vpop.f32.mrf.mxu0
    %v643 = vadd.f32 0.0, %v642
    %v644 = vpop.f32.mrf.mxu0
    %645 = vdwg.mxu0
    %v646 = vadd.f32 %v131, %v640
    %v647 = vadd.f32 %v131, %v643
    %v648 = vld [vmem:[#allocation3] sm:$0xf]
    %v649 = vld [vmem:[#allocation3 + $0x4] sm:$0xf]
    %v650 = vld [vmem:[#allocation3 + $0x8] sm:$0x1]
    %s651 = scalar_lea.vmem [#allocation9], 64
    %v652 = vld [vmem:[%s651] sm:$0xf]
    %v653 = vld [vmem:[%s651 + $0x4] sm:$0xf]
    %v654 = vld [vmem:[%s651 + $0x8] sm:$0xf]
    %v655 = vld [vmem:[%s651 + $0xc] sm:$0xf]
    %v656 = vld [vmem:[%s651 + $0x10] sm:$0xf]
    %v657 = vld [vmem:[%s651 + $0x14] sm:$0xf]
    %v658 = vld [vmem:[%s651 + $0x18] sm:$0xf]
    %v659 = vld [vmem:[%s651 + $0x1c] sm:$0xf]
    %v660 = vld [vmem:[%s651 + $0x20] sm:$0xf]
    %v661 = vld [vmem:[%s651 + $0x24] sm:$0xf]
    %v662 = vld [vmem:[%s651 + $0x28] sm:$0xf]
    %v663 = vld [vmem:[%s651 + $0x2c] sm:$0xf]
    %v664 = vld [vmem:[%s651 + $0x30] sm:$0xf]
    %v665 = vld [vmem:[%s651 + $0x34] sm:$0xf]
    %v666 = vld [vmem:[%s651 + $0x38] sm:$0xf]
    %v667 = vld [vmem:[%s651 + $0x3c] sm:$0xf]
    %v671 = vunpack.c.l.b16 %v648
    %v672 = vunpack.c.l.b16 %v649
    %v673 = vunpack.c.l.b16 %v650
    %v674 = vpack.c.b16 %v672, %v671
    %v675 = vpack.c.b16 %v673, %v673
    %v677 = vshrl.u32 %v674, 16
    %v679 = vshll.u32 %v674, 16
    %v681 = vrot.slane %v679, 1
    %v682 = vor.u32 %v677, %v681
    %v684 = vshll.u32 %v675, 16
    %v686 = vrot.slane %v684, 1
    %v687 = vsel %vm276, %v682, %v686
    %v705 = vunpack.c.l.b16 %v652
    %v706 = vunpack.c.l.b16 %v653
    %v707 = vunpack.c.l.b16 %v654
    %v708 = vunpack.c.l.b16 %v655
    %v709 = vunpack.c.l.b16 %v656
    %v710 = vunpack.c.l.b16 %v657
    %v711 = vunpack.c.l.b16 %v658
    %v712 = vunpack.c.l.b16 %v659
    %v713 = vunpack.c.l.b16 %v660
    %v714 = vunpack.c.l.b16 %v661
    %v715 = vunpack.c.l.b16 %v662
    %v716 = vunpack.c.l.b16 %v663
    %v717 = vunpack.c.l.b16 %v664
    %v718 = vunpack.c.l.b16 %v665
    %v719 = vunpack.c.l.b16 %v666
    %v720 = vunpack.c.l.b16 %v667
    %v721 = vpack.c.b16 %v706, %v705
    %v722 = vpack.c.b16 %v708, %v707
    %v723 = vpack.c.b16 %v710, %v709
    %v724 = vpack.c.b16 %v712, %v711
    %v725 = vpack.c.b16 %v714, %v713
    %v726 = vpack.c.b16 %v716, %v715
    %v727 = vpack.c.b16 %v718, %v717
    %v728 = vpack.c.b16 %v720, %v719
    %737 = vmatprep.subr.bf16.mxu0 0
    %738 = vmatpush1.bf16.msra.mxu0 %v728
    %739 = vmatprep.subr.bf16.mxu0 0
    %740 = vmatpush1.bf16.msra.mxu0 %v727
    %741 = vmatprep.subr.bf16.mxu0 0
    %742 = vmatpush1.bf16.msra.mxu0 %v726
    %743 = vmatprep.subr.bf16.mxu0 0
    %744 = vmatpush1.bf16.msra.mxu0 %v725
    %745 = vmatprep.subr.bf16.mxu0 0
    %746 = vmatpush1.bf16.msra.mxu0 %v724
    %747 = vmatprep.subr.bf16.mxu0 0
    %748 = vmatpush1.bf16.msra.mxu0 %v723
    %749 = vmatprep.subr.bf16.mxu0 0
    %750 = vmatpush1.bf16.msra.mxu0 %v722
    %751 = vmatprep.subr.bf16.mxu0 0
    %752 = vmatpush1.bf16.msra.mxu0 %v721
    %753 = vmatprep.subr.bf16.mxu0 0
    %754 = vmatpush2.bf16.msra.mxu0 0
    %755 = vmatprep.subr.bf16.mxu0 0
    %756 = vmatpush2.bf16.msra.mxu0 0
    %757 = vmatprep.subr.bf16.mxu0 0
    %758 = vmatpush2.bf16.msra.mxu0 0
    %759 = vmatprep.subr.bf16.mxu0 0
    %760 = vmatpush2.bf16.msra.mxu0 0
    %761 = vmatprep.subr.bf16.mxu0 0
    %762 = vmatpush2.bf16.msra.mxu0 0
    %763 = vmatprep.subr.bf16.mxu0 0
    %764 = vmatpush2.bf16.msra.mxu0 0
    %765 = vmatprep.subr.bf16.mxu0 0
    %766 = vmatpush2.bf16.msra.mxu0 0
    %767 = vmatprep.subr.bf16.mxu0 0
    %768 = vmatpush2.bf16.msra.mxu0 0
    %769 = vmatprep.mubr.bf16.mxu0 0
    %770 = vmatmul.mubr.bf16.gmra.mxu0 %v687
    %v771 = vpop.f32.mrf.mxu0
    %v772 = vadd.f32 0.0, %v771
    %v773 = vpop.f32.mrf.mxu0
    %v774 = vpop.f32.mrf.mxu0
    %v775 = vadd.f32 0.0, %v774
    %v776 = vpop.f32.mrf.mxu0
    %777 = vdwg.mxu0
    %v778 = vadd.f32 %v646, %v772
    %v779 = vadd.f32 %v647, %v775
    %v780 = vld [vmem:[#allocation3] sm:$0xe]
    %s781 = scalar_lea.vmem [#allocation9], 128
    %v782 = vld [vmem:[%s781] sm:$0xf]
    %v783 = vld [vmem:[%s781 + $0x4] sm:$0xf]
    %v784 = vld [vmem:[%s781 + $0x8] sm:$0xf]
    %v785 = vld [vmem:[%s781 + $0xc] sm:$0xf]
    %v786 = vld [vmem:[%s781 + $0x10] sm:$0xf]
    %v787 = vld [vmem:[%s781 + $0x14] sm:$0xf]
    %v788 = vld [vmem:[%s781 + $0x18] sm:$0xf]
    %v789 = vld [vmem:[%s781 + $0x1c] sm:$0xf]
    %v790 = vld [vmem:[%s781 + $0x20] sm:$0xf]
    %v791 = vld [vmem:[%s781 + $0x24] sm:$0xf]
    %v792 = vld [vmem:[%s781 + $0x28] sm:$0xf]
    %v793 = vld [vmem:[%s781 + $0x2c] sm:$0xf]
    %v794 = vld [vmem:[%s781 + $0x30] sm:$0xf]
    %v795 = vld [vmem:[%s781 + $0x34] sm:$0xf]
    %v796 = vld [vmem:[%s781 + $0x38] sm:$0xf]
    %v797 = vld [vmem:[%s781 + $0x3c] sm:$0xf]
    %v799 = vunpack.c.l.b16 %v780
    %v800 = vpack.c.b16 %v672, %v799
    %v801 = vrot.slane %v800, 1
    %v802 = vrot.slane %v675, 1
    %v803 = vsel %vm402, %v801, %v802
    %v821 = vunpack.c.l.b16 %v782
    %v822 = vunpack.c.l.b16 %v783
    %v823 = vunpack.c.l.b16 %v784
    %v824 = vunpack.c.l.b16 %v785
    %v825 = vunpack.c.l.b16 %v786
    %v826 = vunpack.c.l.b16 %v787
    %v827 = vunpack.c.l.b16 %v788
    %v828 = vunpack.c.l.b16 %v789
    %v829 = vunpack.c.l.b16 %v790
    %v830 = vunpack.c.l.b16 %v791
    %v831 = vunpack.c.l.b16 %v792
    %v832 = vunpack.c.l.b16 %v793
    %v833 = vunpack.c.l.b16 %v794
    %v834 = vunpack.c.l.b16 %v795
    %v835 = vunpack.c.l.b16 %v796
    %v836 = vunpack.c.l.b16 %v797
    %v837 = vpack.c.b16 %v822, %v821
    %v838 = vpack.c.b16 %v824, %v823
    %v839 = vpack.c.b16 %v826, %v825
    %v840 = vpack.c.b16 %v828, %v827
    %v841 = vpack.c.b16 %v830, %v829
    %v842 = vpack.c.b16 %v832, %v831
    %v843 = vpack.c.b16 %v834, %v833
    %v844 = vpack.c.b16 %v836, %v835
    %853 = vmatprep.subr.bf16.mxu0 0
    %854 = vmatpush1.bf16.msra.mxu0 %v844
    %855 = vmatprep.subr.bf16.mxu0 0
    %856 = vmatpush1.bf16.msra.mxu0 %v843
    %857 = vmatprep.subr.bf16.mxu0 0
    %858 = vmatpush1.bf16.msra.mxu0 %v842
    %859 = vmatprep.subr.bf16.mxu0 0
    %860 = vmatpush1.bf16.msra.mxu0 %v841
    %861 = vmatprep.subr.bf16.mxu0 0
    %862 = vmatpush1.bf16.msra.mxu0 %v840
    %863 = vmatprep.subr.bf16.mxu0 0
    %864 = vmatpush1.bf16.msra.mxu0 %v839
    %865 = vmatprep.subr.bf16.mxu0 0
    %866 = vmatpush1.bf16.msra.mxu0 %v838
    %867 = vmatprep.subr.bf16.mxu0 0
    %868 = vmatpush1.bf16.msra.mxu0 %v837
    %869 = vmatprep.subr.bf16.mxu0 0
    %870 = vmatpush2.bf16.msra.mxu0 0
    %871 = vmatprep.subr.bf16.mxu0 0
    %872 = vmatpush2.bf16.msra.mxu0 0
    %873 = vmatprep.subr.bf16.mxu0 0
    %874 = vmatpush2.bf16.msra.mxu0 0
    %875 = vmatprep.subr.bf16.mxu0 0
    %876 = vmatpush2.bf16.msra.mxu0 0
    %877 = vmatprep.subr.bf16.mxu0 0
    %878 = vmatpush2.bf16.msra.mxu0 0
    %879 = vmatprep.subr.bf16.mxu0 0
    %880 = vmatpush2.bf16.msra.mxu0 0
    %881 = vmatprep.subr.bf16.mxu0 0
    %882 = vmatpush2.bf16.msra.mxu0 0
    %883 = vmatprep.subr.bf16.mxu0 0
    %884 = vmatpush2.bf16.msra.mxu0 0
    %885 = vmatprep.mubr.bf16.mxu0 0
    %886 = vmatmul.mubr.bf16.gmra.mxu0 %v803
    %v887 = vpop.f32.mrf.mxu0
    %v888 = vadd.f32 0.0, %v887
    %v889 = vpop.f32.mrf.mxu0
    %v890 = vpop.f32.mrf.mxu0
    %v891 = vadd.f32 0.0, %v890
    %v892 = vpop.f32.mrf.mxu0
    %893 = vdwg.mxu0
    %v894 = vadd.f32 %v778, %v888
    %v895 = vadd.f32 %v779, %v891
    %v896 = vadd.f32 %v894, %v80
    %v897 = vadd.f32 %v895, %v81
    %v898 = vmax.f32 %v896, 0.0
    %v899 = vmax.f32 %v897, 0.0
    %900 = vst [vmem:[#allocation10] sm:$0xff] %v898
    %901 = vst [vmem:[#allocation10 + $0x8] sm:$0xff] %v899
    // Predicated region
    $region34: #{tpu_custom_call.1} parent=1 // pred_check
      _
    $region35: #{tpu_custom_call.1} parent=1 // pred_check_branch
      %903 = sbr.rel (0) target = $region37
    $region36: #{tpu_custom_call.1} parent=1 // pred_region
      %s905 = ssub.s32 256, 256
      %906 = vsyncadd [#allocation6], %s905
      %s907 = sshll.u32 [#allocation10], 4
      %s908 = int_to_ptr.vmem [resolvable:$true] %s907
      %913 = dma.vmem_to_hbm [thread:$0]  %s908, 256, %s5, [#allocation6], 128, 128, 8
    $region37: #{tpu_custom_call.1} parent=1 // pred_fallthru
      _
    // Predicated region
    $region38: #{tpu_custom_call.1} parent=1 // pred_check
      _
    $region39: #{tpu_custom_call.1} parent=1 // pred_check_branch
      %915 = sbr.rel (0) target = $region41
    $region40: #{tpu_custom_call.1} parent=1 // pred_region
      %916 = dma.done [#allocation6], 256
    $region41: #{tpu_custom_call.1} parent=1 // pred_fallthru
      _
    %917 = vsyncpa [#allocation5], 1
    %918 = vsyncpa [#allocation8], 1
    %919 = vsyncpa [#allocation6], 1

</llo_original>
